<compile_context>
chip_gen: v7x
topology: tpu7x:2x2x1
jax: 0.10.0
libtpu: 0.0.40
codegen_flags: <defaults>
</compile_context>

<pallas_src>
import jax
import jax.numpy as jnp
from jax.experimental import pallas as pl
from jax.experimental.pallas import tpu as pltpu

_MiB = 1024 * 1024


def _round_up(a: int, b: int) -> int:
    return (a + b - 1) // b * b


def _vmem_capacity_bytes() -> int:
    """Best-effort per-core VMEM capacity; conservative (v7x-sized) fallback."""
    try:
        info = pltpu.get_tpu_info()
        cap = getattr(info, "vmem_capacity_bytes", None)
        if cap:
            return int(cap)
    except Exception:
        pass
    return 64 * _MiB


def _pick_divisor_tile(total: int, cap: int, align: int) -> int:
    """Largest divisor of `total` that is a multiple of `align` and <= cap."""
    cap = max(cap, align)
    units = total // align
    for d in range(1, units + 1):
        if units % d == 0:
            cand = (units // d) * align
            if cand <= cap:
                return cand
    return align


# --------------------------------------------------------------------------- kernels
def _ffn_resident_kernel(x_ref, w1_ref, b1_ref, w2_ref, b2_ref, o_ref):
    """Weights fully VMEM-resident: single pass per row tile, no dff tiling."""
    h = jnp.dot(x_ref[...], w1_ref[...], preferred_element_type=jnp.float32)
    h = jnp.maximum(h + b1_ref[...], 0.0)
    out = jnp.dot(h.astype(w2_ref.dtype), w2_ref[...],
                  preferred_element_type=jnp.float32)
    o_ref[...] = (out + b2_ref[...]).astype(o_ref.dtype)


def _ffn_tiled_kernel(x_ref, w1_ref, b1_ref, w2_ref, b2_ref, o_ref, *scratch):
    """Grid point (i, j): row tile i, dff tile j.

    acc_i  = 0                                   (j == 0)
    h_j    = relu(x_i @ w1[:, j] + b1[j])
    acc_i += h_j @ w2[j, :]
    out_i  = acc_i + b2                          (j == last)

    If no scratch is passed, the (f32) output tile itself is the accumulator.
    """
    acc_ref = scratch[0] if scratch else o_ref
    j = pl.program_id(1)

    @pl.when(j == 0)
    def _():
        acc_ref[...] = jnp.zeros_like(acc_ref)

    h = jnp.dot(x_ref[...], w1_ref[...], preferred_element_type=jnp.float32)
    h = jnp.maximum(h + b1_ref[...], 0.0)
    acc_ref[...] += jnp.dot(h.astype(w2_ref.dtype), w2_ref[...],
                            preferred_element_type=jnp.float32)

    @pl.when(j == pl.num_programs(1) - 1)
    def _():
        o_ref[...] = (acc_ref[...] + b2_ref[...]).astype(o_ref.dtype)


# --------------------------------------------------------------------------- wrapper
def prepare_ffn_params(w1, b1, w2, b2, *, mxu_dtype=jnp.bfloat16):
    """One-time weight prep (cast + lane/MXU-aligned zero padding), hoisted out of
    the per-call path so both weight matrices are not re-padded on every forward."""
    din, dff = w1.shape
    assert w2.shape == (dff, din) and b1.shape == (dff,) and b2.shape == (din,)
    wdtype = jnp.dtype(mxu_dtype) if mxu_dtype is not None else jnp.dtype(w1.dtype)
    itemsize = wdtype.itemsize
    # bf16 MXU on v6e/v7x is 2x256x256 -> keep K/N multiples of 256 for packed dtypes.
    align = 256 if itemsize < 4 else 128
    din_p = _round_up(din, align)
    dff_p = _round_up(dff, align)
    # Zero padding is neutral through matmul + ReLU (padded b1 entries are 0,
    # relu(0)=0, padded w2 rows are 0); padded rows/cols are sliced off after.
    w1p = jnp.pad(w1.astype(wdtype), ((0, din_p - din), (0, dff_p - dff)))
    w2p = jnp.pad(w2.astype(wdtype), ((0, dff_p - dff), (0, din_p - din)))
    b1p = jnp.pad(b1.astype(jnp.float32), (0, dff_p - dff)).reshape(1, dff_p)
    b2p = jnp.pad(b2.astype(jnp.float32), (0, din_p - din)).reshape(1, din_p)
    return dict(w1=w1p, b1=b1p, w2=w2p, b2=b2p,
                din=din, dff=dff, align=align, mxu_dtype=wdtype)


def feed_forward(x, params, *, tm=None, tk=None):
    """x: (..., dim_inout). params: output of prepare_ffn_params."""
    w1p, b1p, w2p, b2p = params["w1"], params["b1"], params["w2"], params["b2"]
    din = params["din"]
    align = params["align"]
    mxu_dtype = params["mxu_dtype"]
    din_p, dff_p = w1p.shape

    orig_shape = x.shape
    out_dtype = jnp.dtype(x.dtype)
    x2 = x.reshape(-1, din).astype(mxu_dtype)
    M = x2.shape[0]

    in_itemsize = jnp.dtype(mxu_dtype).itemsize
    out_itemsize = out_dtype.itemsize
    acc_in_out = out_dtype == jnp.dtype(jnp.float32)   # accumulate directly in o_ref

    # ---- per-generation VMEM budget & default tiles ----
    vmem_cap = _vmem_capacity_bytes()
    if vmem_cap >= 96 * _MiB:            # v5e / v6e: 128 MiB per core
        vmem_budget = int(min(vmem_cap - 16 * _MiB, 112 * _MiB))
        tm_def, tk_def = 1024, 1024
    else:                                # v7x: 64 MiB per core; leave headroom
        vmem_budget = int(max(vmem_cap - 12 * _MiB, 32 * _MiB))
        tm_def, tk_def = 512, 512
    if tm is None:
        tm = tm_def
    if tk is None:
        tk = tk_def

    bias_bytes = (b1p.size + b2p.size) * 4
    weight_bytes = (w1p.size + w2p.size) * in_itemsize

    # Shrink tm if the per-row-tile cost alone (x/out double-buffers + f32 acc)
    # would blow the budget; keeps tm a multiple of 64 (>= sublane alignment).
    while tm > 64 and (2 * tm * din_p * (in_itemsize + out_itemsize)
                       + tm * din_p * 4 + 2 * bias_bytes) > vmem_budget // 2:
        tm //= 2

    # ---- row tiling: sublane-aligned, padded so the grid uses only full tiles ----
    row_align = 8 if in_itemsize >= 4 else 16
    Mp = _round_up(M, row_align)
    if Mp >= tm:
        tm = _round_up(tm, row_align)
        Mp = _round_up(Mp, tm)
    else:
        tm = Mp
    x2p = jnp.pad(x2, ((0, Mp - M), (0, din_p - din)))   # only x is padded per call
    n_row_tiles = Mp // tm

    flops = 4 * Mp * din_p * dff_p          # two matmuls, 2*M*K*N each

    # ---- fast path: weights fully VMEM-resident (no dff axis, no accumulator) ----
    resident_need = (2 * weight_bytes + 2 * bias_bytes                 # dbuf weights/bias
                     + 2 * tm * din_p * (in_itemsize + out_itemsize)   # x / out tiles
                     + tm * dff_p * 4 + tm * din_p * 4)                # f32 h + matmul out
    if resident_need <= vmem_budget:
        cost = pl.CostEstimate(
            flops=flops, transcendentals=0,
            bytes_accessed=(x2p.size * in_itemsize + weight_bytes + bias_bytes
                            + Mp * din_p * out_itemsize))
        out = pl.pallas_call(
            _ffn_resident_kernel,
            out_shape=jax.ShapeDtypeStruct((Mp, din_p), out_dtype),
            grid_spec=pltpu.PrefetchScalarGridSpec(
                num_scalar_prefetch=0,
                grid=(n_row_tiles,),
                in_specs=[
                    pl.BlockSpec((tm, din_p), lambda i: (i, 0)),     # x row tile
                    pl.BlockSpec((din_p, dff_p), lambda i: (0, 0)),  # w1 (resident)
                    pl.BlockSpec((1, dff_p), lambda i: (0, 0)),      # b1 (resident)
                    pl.BlockSpec((dff_p, din_p), lambda i: (0, 0)),  # w2 (resident)
                    pl.BlockSpec((1, din_p), lambda i: (0, 0)),      # b2 (resident)
                ],
                out_specs=pl.BlockSpec((tm, din_p), lambda i: (i, 0)),
            ),
            compiler_params=pltpu.CompilerParams(
                dimension_semantics=("parallel",),
                vmem_limit_bytes=vmem_budget,
            ),
            cost_estimate=cost,
        )(x2p, w1p, b1p, w2p, b2p)
    else:
        # ---- tiled path: dff tiled with tk; weights re-streamed per row tile ----
        fixed = (2 * tm * din_p * (in_itemsize + out_itemsize)
                 + (0 if acc_in_out else tm * din_p * 4)
                 + 2 * bias_bytes)
        avail_w = max(vmem_budget - fixed, 4 * _MiB)
        # each `align`-wide dff slice costs 2 (dbuf) * 2 (w1+w2) * align*din_p*itemsize
        tk_cap = max(1, avail_w // (4 * align * din_p * in_itemsize)) * align
        tk = _pick_divisor_tile(dff_p, max(align, min(tk, tk_cap)), align)
        n_dff_tiles = dff_p // tk

        scratch_shapes = [] if acc_in_out else [pltpu.VMEM((tm, din_p), jnp.float32)]
        cost = pl.CostEstimate(
            flops=flops, transcendentals=0,
            bytes_accessed=(x2p.size * in_itemsize
                            + n_row_tiles * (weight_bytes + bias_bytes)  # re-streamed per row tile
                            + Mp * din_p * out_itemsize))
        out = pl.pallas_call(
            _ffn_tiled_kernel,
            out_shape=jax.ShapeDtypeStruct((Mp, din_p), out_dtype),
            grid_spec=pltpu.PrefetchScalarGridSpec(
                num_scalar_prefetch=0,
                grid=(n_row_tiles, n_dff_tiles),
                in_specs=[
                    pl.BlockSpec((tm, din_p), lambda i, j: (i, 0)),   # x rows (resident over j)
                    pl.BlockSpec((din_p, tk), lambda i, j: (0, j)),   # w1 column tile
                    pl.BlockSpec((1, tk), lambda i, j: (0, j)),       # b1 tile
                    pl.BlockSpec((tk, din_p), lambda i, j: (j, 0)),   # w2 row tile
                    pl.BlockSpec((1, din_p), lambda i, j: (0, 0)),    # b2 (constant)
                ],
                out_specs=pl.BlockSpec((tm, din_p), lambda i, j: (i, 0)),
                scratch_shapes=scratch_shapes,
            ),
            compiler_params=pltpu.CompilerParams(
                dimension_semantics=("parallel", "arbitrary"),
                vmem_limit_bytes=vmem_budget,
            ),
            cost_estimate=cost,
        )(x2p, w1p, b1p, w2p, b2p)

    out = out[:M, :din]
    return out.reshape(orig_shape)


def init_params(key, dim_inout, dim_ff, dtype=jnp.float32):
    # Deterministic init mimicking torch.nn.Linear defaults: U(-1/sqrt(in), 1/sqrt(in)).
    k1, k2, k3, k4 = jax.random.split(key, 4)
    bound1 = 1.0 / jnp.sqrt(dim_inout)
    bound2 = 1.0 / jnp.sqrt(dim_ff)
    # stored pre-transposed as (in, out) for the kernel
    w1 = jax.random.uniform(k1, (dim_inout, dim_ff), dtype, -bound1, bound1)
    b1 = jax.random.uniform(k2, (dim_ff,), dtype, -bound1, bound1)
    w2 = jax.random.uniform(k3, (dim_ff, dim_inout), dtype, -bound2, bound2)
    b2 = jax.random.uniform(k4, (dim_inout,), dtype, -bound2, bound2)
    return w1, b1, w2, b2


if __name__ == "__main__":
    batch, seq, dim_inout, dim_ff = 2, 8, 32, 64

    key = jax.random.PRNGKey(0)
    kx, kp = jax.random.split(key)
    x = jax.random.normal(kx, (batch, seq, dim_inout), jnp.float32)
    w1, b1, w2, b2 = init_params(kp, dim_inout, dim_ff)

    # One-time weight prep (bf16 MXU inputs by default; biases / accumulation f32).
    params = prepare_ffn_params(w1, b1, w2, b2, mxu_dtype=jnp.bfloat16)

    y = feed_forward(x, params)
    y = jax.block_until_ready(y)
    assert y.shape == x.shape

    # Reference matching the kernel's precision path (bf16 MXU inputs, f32 accumulate).
    xb, w1b, w2b = x.astype(jnp.bfloat16), w1.astype(jnp.bfloat16), w2.astype(jnp.bfloat16)
    h = jnp.maximum(jnp.dot(xb, w1b, preferred_element_type=jnp.float32) + b1, 0.0)
    ref_bf16 = jnp.dot(h.astype(jnp.bfloat16), w2b, preferred_element_type=jnp.float32) + b2
    assert jnp.allclose(y, ref_bf16, atol=2e-3, rtol=2e-3), float(jnp.max(jnp.abs(y - ref_bf16)))

    # Loose sanity check against the full-f32 reference (bf16 quantization tolerance).
    ref_f32 = jnp.maximum(x @ w1 + b1, 0.0) @ w2 + b2
    assert jnp.allclose(y, ref_f32, atol=5e-2, rtol=5e-2)

    print("KERNEL_OK")
</pallas_src>

<mosaic_0001>
module attributes {stable_mosaic.version = 11 : i64} {
  func.func @_ffn_resident_kernel(%arg0: i32, %arg1: memref<16x256xbf16, #tpu.memory_space<vmem>>, %arg2: memref<256x256xbf16, #tpu.memory_space<vmem>>, %arg3: memref<1x256xf32, #tpu.memory_space<vmem>>, %arg4: memref<256x256xbf16, #tpu.memory_space<vmem>>, %arg5: memref<1x256xf32, #tpu.memory_space<vmem>>, %arg6: memref<16x256xf32, #tpu.memory_space<vmem>>) attributes {dimension_semantics = [#tpu.dimension_semantics<parallel>], iteration_bounds = array<i64: 1>, scalar_prefetch = 0 : i64, scratch_operands = 0 : i64, tpu.core_type = #tpu.core_type<tc>, window_params = [{transform_indices = @transform_0, window_bounds = array<i64: 16, 256>}, {pipeline_mode = #tpu.pipeline_mode<synchronous>, transform_indices = @transform_1, window_bounds = array<i64: 256, 256>}, {pipeline_mode = #tpu.pipeline_mode<synchronous>, transform_indices = @transform_2, window_bounds = array<i64: 1, 256>}, {pipeline_mode = #tpu.pipeline_mode<synchronous>, transform_indices = @transform_3, window_bounds = array<i64: 256, 256>}, {pipeline_mode = #tpu.pipeline_mode<synchronous>, transform_indices = @transform_4, window_bounds = array<i64: 1, 256>}, {transform_indices = @transform_5, window_bounds = array<i64: 16, 256>}]} {
    %c0 = arith.constant 0 : index
    %c0_0 = arith.constant 0 : index
    %0 = vector.load %arg1[%c0, %c0_0] : memref<16x256xbf16, #tpu.memory_space<vmem>>, vector<16x256xbf16>
    %c0_1 = arith.constant 0 : index
    %c0_2 = arith.constant 0 : index
    %1 = vector.load %arg2[%c0_1, %c0_2] : memref<256x256xbf16, #tpu.memory_space<vmem>>, vector<256x256xbf16>
    %cst = arith.constant dense<0.000000e+00> : vector<16x256xf32>
    %2 = tpu.matmul %0, %1, %cst {dimension_numbers = #tpu.dot_dimension_numbers<[1], [0], [0], [1], [0, 0, 1, 1], [], []>} : vector<16x256xbf16>, vector<256x256xbf16>, vector<16x256xf32> -> vector<16x256xf32>
    %c0_3 = arith.constant 0 : index
    %c0_4 = arith.constant 0 : index
    %3 = vector.load %arg3[%c0_3, %c0_4] : memref<1x256xf32, #tpu.memory_space<vmem>>, vector<1x256xf32>
    %4 = vector.broadcast %3 : vector<1x256xf32> to vector<16x256xf32>
    %5 = arith.addf %2, %4 : vector<16x256xf32>
    %cst_5 = arith.constant 0.000000e+00 : f32
    %6 = vector.broadcast %cst_5 : f32 to vector<16x256xf32>
    %7 = arith.maximumf %5, %6 : vector<16x256xf32>
    %8 = arith.truncf %7 : vector<16x256xf32> to vector<16x256xbf16>
    %c0_6 = arith.constant 0 : index
    %c0_7 = arith.constant 0 : index
    %9 = vector.load %arg4[%c0_6, %c0_7] : memref<256x256xbf16, #tpu.memory_space<vmem>>, vector<256x256xbf16>
    %cst_8 = arith.constant dense<0.000000e+00> : vector<16x256xf32>
    %10 = tpu.matmul %8, %9, %cst_8 {dimension_numbers = #tpu.dot_dimension_numbers<[1], [0], [0], [1], [0, 0, 1, 1], [], []>} : vector<16x256xbf16>, vector<256x256xbf16>, vector<16x256xf32> -> vector<16x256xf32>
    %c0_9 = arith.constant 0 : index
    %c0_10 = arith.constant 0 : index
    %11 = vector.load %arg5[%c0_9, %c0_10] : memref<1x256xf32, #tpu.memory_space<vmem>>, vector<1x256xf32>
    %12 = vector.broadcast %11 : vector<1x256xf32> to vector<16x256xf32>
    %13 = arith.addf %10, %12 : vector<16x256xf32>
    %c0_11 = arith.constant 0 : index
    %c0_12 = arith.constant 0 : index
    %14 = vector.load %arg6[%c0_11, %c0_12] : memref<16x256xf32, #tpu.memory_space<vmem>>, vector<16x256xf32>
    tpu.vector_store %arg6[%c0_11, %c0_12], %13 {strides = array<i32>} : memref<16x256xf32, #tpu.memory_space<vmem>>, vector<16x256xf32>,
    return
  }
  func.func @transform_0(%arg0: i32) -> (i32, i32) {
    %c0_i32 = arith.constant 0 : i32
    %c0_i32_0 = arith.constant 0 : i32
    return %arg0, %c0_i32 : i32, i32
  }
  func.func @transform_1(%arg0: i32) -> (i32, i32) {
    %c0_i32 = arith.constant 0 : i32
    %c0_i32_0 = arith.constant 0 : i32
    %c0_i32_1 = arith.constant 0 : i32
    return %c0_i32, %c0_i32_0 : i32, i32
  }
  func.func @transform_2(%arg0: i32) -> (i32, i32) {
    %c0_i32 = arith.constant 0 : i32
    %c0_i32_0 = arith.constant 0 : i32
    %c0_i32_1 = arith.constant 0 : i32
    return %c0_i32, %c0_i32_0 : i32, i32
  }
  func.func @transform_3(%arg0: i32) -> (i32, i32) {
    %c0_i32 = arith.constant 0 : i32
    %c0_i32_0 = arith.constant 0 : i32
    %c0_i32_1 = arith.constant 0 : i32
    return %c0_i32, %c0_i32_0 : i32, i32
  }
  func.func @transform_4(%arg0: i32) -> (i32, i32) {
    %c0_i32 = arith.constant 0 : i32
    %c0_i32_0 = arith.constant 0 : i32
    %c0_i32_1 = arith.constant 0 : i32
    return %c0_i32, %c0_i32_0 : i32, i32
  }
  func.func @transform_5(%arg0: i32) -> (i32, i32) {
    %c0_i32 = arith.constant 0 : i32
    %c0_i32_0 = arith.constant 0 : i32
    return %arg0, %c0_i32 : i32, i32
  }
}

</mosaic_0001>

<llo_original>
// kernel: tpu_custom_call.1
$region0: #{tpu_custom_call.1}
  #allocation0 [shape = 'u32[]', space=smem, size = 0x4, offset = 0x4, fixed_abs, tag = 'smem constant byte address 0x4 - core index']
  #allocation1 [shape = 'u32[144,128]{1,0:T(1,128)}', space=vmem, size = 0x12000, scoped, tag = 'internal scratch']
  %s0 = inlined_call_operand.hbm [shape: bf16[16,256], index: 0, kind: input, shape index: {}]
  %s1 = inlined_call_operand.hbm [shape: bf16[256,256], index: 1, kind: input, shape index: {}]
  %s2 = inlined_call_operand.vmem [shape: f32[1,256], index: 2, kind: input, shape index: {}]
  %s3 = inlined_call_operand.hbm [shape: bf16[256,256], index: 3, kind: input, shape index: {}]
  %s4 = inlined_call_operand.vmem [shape: f32[1,256], index: 4, kind: input, shape index: {}]
  %s5 = inlined_call_operand.hbm [shape: f32[16,256], index: 5, kind: output, shape index: {}]
  %s6 = sld [smem:[#allocation0]]
  $region42: #{tpu_custom_call.1} parent=0
    _
  %s8 = ssub.s32 1, %s6
  %s9 = scalar_select 0, %s8, %s6
  $region1: #{tpu_custom_call.1} parent=0
    #allocation2 [shape = 'u8[8192]{0}', space=vmem, size = 0x2000, scoped, tag = 'input window, operand 0, single buffered']
    #allocation3 [shape = 's32[1]{0}', space=sflag, size = 0x4, scoped, tag = 'scoped memory for tpu_custom_call.1']
    #allocation4 [shape = 's32[1]{0}', space=sflag, size = 0x4, scoped, tag = 'scoped memory for tpu_custom_call.1']
    #allocation5 [shape = 'u8[131072]{0}', space=vmem, size = 0x20000, scoped, tag = 'input window, operand 1, single buffered']
    #allocation6 [shape = 's32[1]{0}', space=sflag, size = 0x4, scoped, tag = 'scoped memory for tpu_custom_call.1']
    #allocation7 [shape = 'u8[131072]{0}', space=vmem, size = 0x20000, scoped, tag = 'input window, operand 3, single buffered']
    #allocation8 [shape = 'u8[16384]{0}', space=vmem, size = 0x4000, scoped, tag = 'output window, operand 0, single buffered']
    %10 = vsyncpa [#allocation3], 0
    %11 = vsyncpa [#allocation6], 0
    %12 = vsyncpa [#allocation4], 0
    // Predicated region
    $region2: #{tpu_custom_call.1} parent=1 // pred_check
      _
    $region3: #{tpu_custom_call.1} parent=1 // pred_check_branch
      %14 = sbr.rel (0) target = $region5
    $region4: #{tpu_custom_call.1} parent=1 // pred_region
      %s16 = ssub.s32 256, 256
      %17 = vsyncadd [#allocation3], %s16
      %s18 = sshll.u32 [#allocation2], 4
      %s19 = int_to_ptr.vmem [resolvable:$true] %s18
      %24 = dma.hbm_to_vmem [thread:$0]  %s0, 256, %s19, [#allocation3], 128, 128, 8
    $region5: #{tpu_custom_call.1} parent=1 // pred_fallthru
      _
    // Predicated region
    $region6: #{tpu_custom_call.1} parent=1 // pred_check
      _
    $region7: #{tpu_custom_call.1} parent=1 // pred_check_branch
      %26 = sbr.rel (0) target = $region9
    $region8: #{tpu_custom_call.1} parent=1 // pred_region
      %s28 = ssub.s32 4096, 4096
      %29 = vsyncadd [#allocation6], %s28
      %s30 = sshll.u32 [#allocation5], 4
      %s31 = int_to_ptr.vmem [resolvable:$true] %s30
      %36 = dma.hbm_to_vmem [thread:$0]  %s1, 4096, %s31, [#allocation6], 128, 128, 8
    $region9: #{tpu_custom_call.1} parent=1 // pred_fallthru
      _
    // Predicated region
    $region10: #{tpu_custom_call.1} parent=1 // pred_check
      _
    $region11: #{tpu_custom_call.1} parent=1 // pred_check_branch
      %38 = sbr.rel (0) target = $region13
    $region12: #{tpu_custom_call.1} parent=1 // pred_region
      _
    $region13: #{tpu_custom_call.1} parent=1 // pred_fallthru
      _
    // Predicated region
    $region14: #{tpu_custom_call.1} parent=1 // pred_check
      _
    $region15: #{tpu_custom_call.1} parent=1 // pred_check_branch
      %40 = sbr.rel (0) target = $region17
    $region16: #{tpu_custom_call.1} parent=1 // pred_region
      %s42 = ssub.s32 4096, 4096
      %43 = vsyncadd [#allocation6], %s42
      %s44 = sshll.u32 [#allocation7], 4
      %s45 = int_to_ptr.vmem [resolvable:$true] %s44
      %50 = dma.hbm_to_vmem [thread:$0]  %s3, 4096, %s45, [#allocation6], 128, 128, 8
    $region17: #{tpu_custom_call.1} parent=1 // pred_fallthru
      _
    // Predicated region
    $region18: #{tpu_custom_call.1} parent=1 // pred_check
      _
    $region19: #{tpu_custom_call.1} parent=1 // pred_check_branch
      %52 = sbr.rel (0) target = $region21
    $region20: #{tpu_custom_call.1} parent=1 // pred_region
      _
    $region21: #{tpu_custom_call.1} parent=1 // pred_fallthru
      _
    // Predicated region
    $region22: #{tpu_custom_call.1} parent=1 // pred_check
      _
    $region23: #{tpu_custom_call.1} parent=1 // pred_check_branch
      %54 = sbr.rel (0) target = $region25
    $region24: #{tpu_custom_call.1} parent=1 // pred_region
      %55 = dma.done [#allocation3], 256
    $region25: #{tpu_custom_call.1} parent=1 // pred_fallthru
      _
    // Predicated region
    $region26: #{tpu_custom_call.1} parent=1 // pred_check
      _
    $region27: #{tpu_custom_call.1} parent=1 // pred_check_branch
      %57 = sbr.rel (0) target = $region29
    $region28: #{tpu_custom_call.1} parent=1 // pred_region
      %58 = dma.done [#allocation6], 4096
    $region29: #{tpu_custom_call.1} parent=1 // pred_fallthru
      _
    // Predicated region
    $region30: #{tpu_custom_call.1} parent=1 // pred_check
      _
    $region31: #{tpu_custom_call.1} parent=1 // pred_check_branch
      %60 = sbr.rel (0) target = $region33
    $region32: #{tpu_custom_call.1} parent=1 // pred_region
      %61 = dma.done [#allocation6], 4096
    $region33: #{tpu_custom_call.1} parent=1 // pred_fallthru
      _
    %v62 = vld [vmem:[#allocation2] sm:$0xff]
    %v63 = vld [vmem:[#allocation2 + $0x8] sm:$0xff]
    %v64 = vld [vmem:[#allocation5] sm:$0xff]
    %v65 = vld [vmem:[#allocation5 + $0x8] sm:$0xff]
    %v66 = vld [vmem:[#allocation5 + $0x10] sm:$0xff]
    %v67 = vld [vmem:[#allocation5 + $0x18] sm:$0xff]
    %v68 = vld [vmem:[#allocation5 + $0x20] sm:$0xff]
    %v69 = vld [vmem:[#allocation5 + $0x28] sm:$0xff]
    %v70 = vld [vmem:[#allocation5 + $0x30] sm:$0xff]
    %v71 = vld [vmem:[#allocation5 + $0x38] sm:$0xff]
    %v72 = vld [vmem:[#allocation5 + $0x40] sm:$0xff]
    %v73 = vld [vmem:[#allocation5 + $0x48] sm:$0xff]
    %v74 = vld [vmem:[#allocation5 + $0x50] sm:$0xff]
    %v75 = vld [vmem:[#allocation5 + $0x58] sm:$0xff]
    %v76 = vld [vmem:[#allocation5 + $0x60] sm:$0xff]
    %v77 = vld [vmem:[#allocation5 + $0x68] sm:$0xff]
    %v78 = vld [vmem:[#allocation5 + $0x70] sm:$0xff]
    %v79 = vld [vmem:[#allocation5 + $0x78] sm:$0xff]
    %v80 = vld [vmem:[#allocation5 + $0x80] sm:$0xff]
    %v81 = vld [vmem:[#allocation5 + $0x88] sm:$0xff]
    %v82 = vld [vmem:[#allocation5 + $0x90] sm:$0xff]
    %v83 = vld [vmem:[#allocation5 + $0x98] sm:$0xff]
    %v84 = vld [vmem:[#allocation5 + $0xa0] sm:$0xff]
    %v85 = vld [vmem:[#allocation5 + $0xa8] sm:$0xff]
    %v86 = vld [vmem:[#allocation5 + $0xb0] sm:$0xff]
    %v87 = vld [vmem:[#allocation5 + $0xb8] sm:$0xff]
    %v88 = vld [vmem:[#allocation5 + $0xc0] sm:$0xff]
    %v89 = vld [vmem:[#allocation5 + $0xc8] sm:$0xff]
    %v90 = vld [vmem:[#allocation5 + $0xd0] sm:$0xff]
    %v91 = vld [vmem:[#allocation5 + $0xd8] sm:$0xff]
    %v92 = vld [vmem:[#allocation5 + $0xe0] sm:$0xff]
    %v93 = vld [vmem:[#allocation5 + $0xe8] sm:$0xff]
    %v94 = vld [vmem:[#allocation5 + $0xf0] sm:$0xff]
    %v95 = vld [vmem:[#allocation5 + $0xf8] sm:$0xff]
    %v96 = vld [vmem:[%s2] sm:$0x3]
    %v98 = vlaneseq
    %v99 = vshrl.u32 %v98, 7
    %v100 = vsub.s32 0, %v99
    %v101 = vrot.slane %v96, %v100
    %v102 = vlaneseq
    %v103 = vshrl.u32 %v102, 7
    %v104 = vsub.s32 1, %v103
    %v105 = vrot.slane %v96, %v104
    %v110 = vunpack.c.l.b16 %v62
    %v111 = vunpack.c.h.b16 %v62
    %v112 = vunpack.c.l.b16 %v63
    %v113 = vunpack.c.h.b16 %v63
    %v114 = vpack.c.b16 %v112, %v110
    %v115 = vpack.c.b16 %v113, %v111
    %v150 = vunpack.c.l.b16 %v64
    %v151 = vunpack.c.h.b16 %v64
    %v152 = vunpack.c.l.b16 %v65
    %v153 = vunpack.c.h.b16 %v65
    %v154 = vunpack.c.l.b16 %v66
    %v155 = vunpack.c.h.b16 %v66
    %v156 = vunpack.c.l.b16 %v67
    %v157 = vunpack.c.h.b16 %v67
    %v158 = vunpack.c.l.b16 %v68
    %v159 = vunpack.c.h.b16 %v68
    %v160 = vunpack.c.l.b16 %v69
    %v161 = vunpack.c.h.b16 %v69
    %v162 = vunpack.c.l.b16 %v70
    %v163 = vunpack.c.h.b16 %v70
    %v164 = vunpack.c.l.b16 %v71
    %v165 = vunpack.c.h.b16 %v71
    %v166 = vunpack.c.l.b16 %v72
    %v167 = vunpack.c.h.b16 %v72
    %v168 = vunpack.c.l.b16 %v73
    %v169 = vunpack.c.h.b16 %v73
    %v170 = vunpack.c.l.b16 %v74
    %v171 = vunpack.c.h.b16 %v74
    %v172 = vunpack.c.l.b16 %v75
    %v173 = vunpack.c.h.b16 %v75
    %v174 = vunpack.c.l.b16 %v76
    %v175 = vunpack.c.h.b16 %v76
    %v176 = vunpack.c.l.b16 %v77
    %v177 = vunpack.c.h.b16 %v77
    %v178 = vunpack.c.l.b16 %v78
    %v179 = vunpack.c.h.b16 %v78
    %v180 = vunpack.c.l.b16 %v79
    %v181 = vunpack.c.h.b16 %v79
    %v182 = vunpack.c.l.b16 %v80
    %v183 = vunpack.c.h.b16 %v80
    %v184 = vunpack.c.l.b16 %v81
    %v185 = vunpack.c.h.b16 %v81
    %v186 = vunpack.c.l.b16 %v82
    %v187 = vunpack.c.h.b16 %v82
    %v188 = vunpack.c.l.b16 %v83
    %v189 = vunpack.c.h.b16 %v83
    %v190 = vunpack.c.l.b16 %v84
    %v191 = vunpack.c.h.b16 %v84
    %v192 = vunpack.c.l.b16 %v85
    %v193 = vunpack.c.h.b16 %v85
    %v194 = vunpack.c.l.b16 %v86
    %v195 = vunpack.c.h.b16 %v86
    %v196 = vunpack.c.l.b16 %v87
    %v197 = vunpack.c.h.b16 %v87
    %v198 = vunpack.c.l.b16 %v88
    %v199 = vunpack.c.h.b16 %v88
    %v200 = vunpack.c.l.b16 %v89
    %v201 = vunpack.c.h.b16 %v89
    %v202 = vunpack.c.l.b16 %v90
    %v203 = vunpack.c.h.b16 %v90
    %v204 = vunpack.c.l.b16 %v91
    %v205 = vunpack.c.h.b16 %v91
    %v206 = vunpack.c.l.b16 %v92
    %v207 = vunpack.c.h.b16 %v92
    %v208 = vunpack.c.l.b16 %v93
    %v209 = vunpack.c.h.b16 %v93
    %v210 = vunpack.c.l.b16 %v94
    %v211 = vunpack.c.h.b16 %v94
    %v212 = vunpack.c.l.b16 %v95
    %v213 = vunpack.c.h.b16 %v95
    %v214 = vpack.c.b16 %v152, %v150
    %v215 = vpack.c.b16 %v153, %v151
    %v216 = vpack.c.b16 %v156, %v154
    %v217 = vpack.c.b16 %v157, %v155
    %v218 = vpack.c.b16 %v160, %v158
    %v219 = vpack.c.b16 %v161, %v159
    %v220 = vpack.c.b16 %v164, %v162
    %v221 = vpack.c.b16 %v165, %v163
    %v222 = vpack.c.b16 %v168, %v166
    %v223 = vpack.c.b16 %v169, %v167
    %v224 = vpack.c.b16 %v172, %v170
    %v225 = vpack.c.b16 %v173, %v171
    %v226 = vpack.c.b16 %v176, %v174
    %v227 = vpack.c.b16 %v177, %v175
    %v228 = vpack.c.b16 %v180, %v178
    %v229 = vpack.c.b16 %v181, %v179
    %v230 = vpack.c.b16 %v184, %v182
    %v231 = vpack.c.b16 %v185, %v183
    %v232 = vpack.c.b16 %v188, %v186
    %v233 = vpack.c.b16 %v189, %v187
    %v234 = vpack.c.b16 %v192, %v190
    %v235 = vpack.c.b16 %v193, %v191
    %v236 = vpack.c.b16 %v196, %v194
    %v237 = vpack.c.b16 %v197, %v195
    %v238 = vpack.c.b16 %v200, %v198
    %v239 = vpack.c.b16 %v201, %v199
    %v240 = vpack.c.b16 %v204, %v202
    %v241 = vpack.c.b16 %v205, %v203
    %v242 = vpack.c.b16 %v208, %v206
    %v243 = vpack.c.b16 %v209, %v207
    %v244 = vpack.c.b16 %v212, %v210
    %v245 = vpack.c.b16 %v213, %v211
    %278 = vmatprep.subr.bf16.mxu0 %v215
    %279 = vmatpush1.bf16.msra.mxu0 %v214
    %280 = vmatprep.subr.bf16.mxu0 %v217
    %281 = vmatpush1.bf16.msra.mxu0 %v216
    %282 = vmatprep.subr.bf16.mxu0 %v219
    %283 = vmatpush1.bf16.msra.mxu0 %v218
    %284 = vmatprep.subr.bf16.mxu0 %v221
    %285 = vmatpush1.bf16.msra.mxu0 %v220
    %286 = vmatprep.subr.bf16.mxu0 %v223
    %287 = vmatpush1.bf16.msra.mxu0 %v222
    %288 = vmatprep.subr.bf16.mxu0 %v225
    %289 = vmatpush1.bf16.msra.mxu0 %v224
    %290 = vmatprep.subr.bf16.mxu0 %v227
    %291 = vmatpush1.bf16.msra.mxu0 %v226
    %292 = vmatprep.subr.bf16.mxu0 %v229
    %293 = vmatpush1.bf16.msra.mxu0 %v228
    %294 = vmatprep.subr.bf16.mxu0 %v231
    %295 = vmatpush1.bf16.msra.mxu0 %v230
    %296 = vmatprep.subr.bf16.mxu0 %v233
    %297 = vmatpush1.bf16.msra.mxu0 %v232
    %298 = vmatprep.subr.bf16.mxu0 %v235
    %299 = vmatpush1.bf16.msra.mxu0 %v234
    %300 = vmatprep.subr.bf16.mxu0 %v237
    %301 = vmatpush1.bf16.msra.mxu0 %v236
    %302 = vmatprep.subr.bf16.mxu0 %v239
    %303 = vmatpush1.bf16.msra.mxu0 %v238
    %304 = vmatprep.subr.bf16.mxu0 %v241
    %305 = vmatpush1.bf16.msra.mxu0 %v240
    %306 = vmatprep.subr.bf16.mxu0 %v243
    %307 = vmatpush1.bf16.msra.mxu0 %v242
    %308 = vmatprep.subr.bf16.mxu0 %v245
    %309 = vmatpush1.bf16.msra.mxu0 %v244
    %310 = vmatprep.mubr.bf16.mxu0 %v115
    %311 = vmatmul.mubr.bf16.gmra.mrb[0].mxu0 %v114
    %v312 = vpop.f32.mrb[0].mxu0
    %v313 = vadd.f32 %v101, %v312
    %v314 = vpop.f32.mrb[0].mxu0
    %v315 = vadd.f32 %v105, %v314
    %v316 = vpop.f32.mrb[0].mxu0
    %v317 = vadd.f32 %v101, %v316
    %v318 = vpop.f32.mrb[0].mxu0
    %v319 = vadd.f32 %v105, %v318
    %320 = vdwg.mxu0
    %v321 = vmax.f32 %v313, 0.0
    %v322 = vmax.f32 %v315, 0.0
    %v323 = vmax.f32 %v317, 0.0
    %v324 = vmax.f32 %v319, 0.0
    %v325 = vpack.c.bf16 %v323, %v321
    %v326 = vpack.c.bf16 %v324, %v322
    %v327 = vld [vmem:[#allocation7] sm:$0xff]
    %v328 = vld [vmem:[#allocation7 + $0x8] sm:$0xff]
    %v329 = vld [vmem:[#allocation7 + $0x10] sm:$0xff]
    %v330 = vld [vmem:[#allocation7 + $0x18] sm:$0xff]
    %v331 = vld [vmem:[#allocation7 + $0x20] sm:$0xff]
    %v332 = vld [vmem:[#allocation7 + $0x28] sm:$0xff]
    %v333 = vld [vmem:[#allocation7 + $0x30] sm:$0xff]
    %v334 = vld [vmem:[#allocation7 + $0x38] sm:$0xff]
    %v335 = vld [vmem:[#allocation7 + $0x40] sm:$0xff]
    %v336 = vld [vmem:[#allocation7 + $0x48] sm:$0xff]
    %v337 = vld [vmem:[#allocation7 + $0x50] sm:$0xff]
    %v338 = vld [vmem:[#allocation7 + $0x58] sm:$0xff]
    %v339 = vld [vmem:[#allocation7 + $0x60] sm:$0xff]
    %v340 = vld [vmem:[#allocation7 + $0x68] sm:$0xff]
    %v341 = vld [vmem:[#allocation7 + $0x70] sm:$0xff]
    %v342 = vld [vmem:[#allocation7 + $0x78] sm:$0xff]
    %v343 = vld [vmem:[#allocation7 + $0x80] sm:$0xff]
    %v344 = vld [vmem:[#allocation7 + $0x88] sm:$0xff]
    %v345 = vld [vmem:[#allocation7 + $0x90] sm:$0xff]
    %v346 = vld [vmem:[#allocation7 + $0x98] sm:$0xff]
    %v347 = vld [vmem:[#allocation7 + $0xa0] sm:$0xff]
    %v348 = vld [vmem:[#allocation7 + $0xa8] sm:$0xff]
    %v349 = vld [vmem:[#allocation7 + $0xb0] sm:$0xff]
    %v350 = vld [vmem:[#allocation7 + $0xb8] sm:$0xff]
    %v351 = vld [vmem:[#allocation7 + $0xc0] sm:$0xff]
    %v352 = vld [vmem:[#allocation7 + $0xc8] sm:$0xff]
    %v353 = vld [vmem:[#allocation7 + $0xd0] sm:$0xff]
    %v354 = vld [vmem:[#allocation7 + $0xd8] sm:$0xff]
    %v355 = vld [vmem:[#allocation7 + $0xe0] sm:$0xff]
    %v356 = vld [vmem:[#allocation7 + $0xe8] sm:$0xff]
    %v357 = vld [vmem:[#allocation7 + $0xf0] sm:$0xff]
    %v358 = vld [vmem:[#allocation7 + $0xf8] sm:$0xff]
    %v359 = vld [vmem:[%s4] sm:$0x3]
    %v361 = vlaneseq
    %v362 = vshrl.u32 %v361, 7
    %v363 = vsub.s32 0, %v362
    %v364 = vrot.slane %v359, %v363
    %v365 = vlaneseq
    %v366 = vshrl.u32 %v365, 7
    %v367 = vsub.s32 1, %v366
    %v368 = vrot.slane %v359, %v367
    %v403 = vunpack.c.l.b16 %v327
    %v404 = vunpack.c.h.b16 %v327
    %v405 = vunpack.c.l.b16 %v328
    %v406 = vunpack.c.h.b16 %v328
    %v407 = vunpack.c.l.b16 %v329
    %v408 = vunpack.c.h.b16 %v329
    %v409 = vunpack.c.l.b16 %v330
    %v410 = vunpack.c.h.b16 %v330
    %v411 = vunpack.c.l.b16 %v331
    %v412 = vunpack.c.h.b16 %v331
    %v413 = vunpack.c.l.b16 %v332
    %v414 = vunpack.c.h.b16 %v332
    %v415 = vunpack.c.l.b16 %v333
    %v416 = vunpack.c.h.b16 %v333
    %v417 = vunpack.c.l.b16 %v334
    %v418 = vunpack.c.h.b16 %v334
    %v419 = vunpack.c.l.b16 %v335
    %v420 = vunpack.c.h.b16 %v335
    %v421 = vunpack.c.l.b16 %v336
    %v422 = vunpack.c.h.b16 %v336
    %v423 = vunpack.c.l.b16 %v337
    %v424 = vunpack.c.h.b16 %v337
    %v425 = vunpack.c.l.b16 %v338
    %v426 = vunpack.c.h.b16 %v338
    %v427 = vunpack.c.l.b16 %v339
    %v428 = vunpack.c.h.b16 %v339
    %v429 = vunpack.c.l.b16 %v340
    %v430 = vunpack.c.h.b16 %v340
    %v431 = vunpack.c.l.b16 %v341
    %v432 = vunpack.c.h.b16 %v341
    %v433 = vunpack.c.l.b16 %v342
    %v434 = vunpack.c.h.b16 %v342
    %v435 = vunpack.c.l.b16 %v343
    %v436 = vunpack.c.h.b16 %v343
    %v437 = vunpack.c.l.b16 %v344
    %v438 = vunpack.c.h.b16 %v344
    %v439 = vunpack.c.l.b16 %v345
    %v440 = vunpack.c.h.b16 %v345
    %v441 = vunpack.c.l.b16 %v346
    %v442 = vunpack.c.h.b16 %v346
    %v443 = vunpack.c.l.b16 %v347
    %v444 = vunpack.c.h.b16 %v347
    %v445 = vunpack.c.l.b16 %v348
    %v446 = vunpack.c.h.b16 %v348
    %v447 = vunpack.c.l.b16 %v349
    %v448 = vunpack.c.h.b16 %v349
    %v449 = vunpack.c.l.b16 %v350
    %v450 = vunpack.c.h.b16 %v350
    %v451 = vunpack.c.l.b16 %v351
    %v452 = vunpack.c.h.b16 %v351
    %v453 = vunpack.c.l.b16 %v352
    %v454 = vunpack.c.h.b16 %v352
    %v455 = vunpack.c.l.b16 %v353
    %v456 = vunpack.c.h.b16 %v353
    %v457 = vunpack.c.l.b16 %v354
    %v458 = vunpack.c.h.b16 %v354
    %v459 = vunpack.c.l.b16 %v355
    %v460 = vunpack.c.h.b16 %v355
    %v461 = vunpack.c.l.b16 %v356
    %v462 = vunpack.c.h.b16 %v356
    %v463 = vunpack.c.l.b16 %v357
    %v464 = vunpack.c.h.b16 %v357
    %v465 = vunpack.c.l.b16 %v358
    %v466 = vunpack.c.h.b16 %v358
    %v467 = vpack.c.b16 %v405, %v403
    %v468 = vpack.c.b16 %v406, %v404
    %v469 = vpack.c.b16 %v409, %v407
    %v470 = vpack.c.b16 %v410, %v408
    %v471 = vpack.c.b16 %v413, %v411
    %v472 = vpack.c.b16 %v414, %v412
    %v473 = vpack.c.b16 %v417, %v415
    %v474 = vpack.c.b16 %v418, %v416
    %v475 = vpack.c.b16 %v421, %v419
    %v476 = vpack.c.b16 %v422, %v420
    %v477 = vpack.c.b16 %v425, %v423
    %v478 = vpack.c.b16 %v426, %v424
    %v479 = vpack.c.b16 %v429, %v427
    %v480 = vpack.c.b16 %v430, %v428
    %v481 = vpack.c.b16 %v433, %v431
    %v482 = vpack.c.b16 %v434, %v432
    %v483 = vpack.c.b16 %v437, %v435
    %v484 = vpack.c.b16 %v438, %v436
    %v485 = vpack.c.b16 %v441, %v439
    %v486 = vpack.c.b16 %v442, %v440
    %v487 = vpack.c.b16 %v445, %v443
    %v488 = vpack.c.b16 %v446, %v444
    %v489 = vpack.c.b16 %v449, %v447
    %v490 = vpack.c.b16 %v450, %v448
    %v491 = vpack.c.b16 %v453, %v451
    %v492 = vpack.c.b16 %v454, %v452
    %v493 = vpack.c.b16 %v457, %v455
    %v494 = vpack.c.b16 %v458, %v456
    %v495 = vpack.c.b16 %v461, %v459
    %v496 = vpack.c.b16 %v462, %v460
    %v497 = vpack.c.b16 %v465, %v463
    %v498 = vpack.c.b16 %v466, %v464
    %531 = vmatprep.subr.bf16.mxu0 %v468
    %532 = vmatpush1.bf16.msra.mxu0 %v467
    %533 = vmatprep.subr.bf16.mxu0 %v470
    %534 = vmatpush1.bf16.msra.mxu0 %v469
    %535 = vmatprep.subr.bf16.mxu0 %v472
    %536 = vmatpush1.bf16.msra.mxu0 %v471
    %537 = vmatprep.subr.bf16.mxu0 %v474
    %538 = vmatpush1.bf16.msra.mxu0 %v473
    %539 = vmatprep.subr.bf16.mxu0 %v476
    %540 = vmatpush1.bf16.msra.mxu0 %v475
    %541 = vmatprep.subr.bf16.mxu0 %v478
    %542 = vmatpush1.bf16.msra.mxu0 %v477
    %543 = vmatprep.subr.bf16.mxu0 %v480
    %544 = vmatpush1.bf16.msra.mxu0 %v479
    %545 = vmatprep.subr.bf16.mxu0 %v482
    %546 = vmatpush1.bf16.msra.mxu0 %v481
    %547 = vmatprep.subr.bf16.mxu0 %v484
    %548 = vmatpush1.bf16.msra.mxu0 %v483
    %549 = vmatprep.subr.bf16.mxu0 %v486
    %550 = vmatpush1.bf16.msra.mxu0 %v485
    %551 = vmatprep.subr.bf16.mxu0 %v488
    %552 = vmatpush1.bf16.msra.mxu0 %v487
    %553 = vmatprep.subr.bf16.mxu0 %v490
    %554 = vmatpush1.bf16.msra.mxu0 %v489
    %555 = vmatprep.subr.bf16.mxu0 %v492
    %556 = vmatpush1.bf16.msra.mxu0 %v491
    %557 = vmatprep.subr.bf16.mxu0 %v494
    %558 = vmatpush1.bf16.msra.mxu0 %v493
    %559 = vmatprep.subr.bf16.mxu0 %v496
    %560 = vmatpush1.bf16.msra.mxu0 %v495
    %561 = vmatprep.subr.bf16.mxu0 %v498
    %562 = vmatpush1.bf16.msra.mxu0 %v497
    %563 = vmatprep.mubr.bf16.mxu0 %v326
    %564 = vmatmul.mubr.bf16.gmra.mrb[0].mxu0 %v325
    %v565 = vpop.f32.mrb[0].mxu0
    %v566 = vadd.f32 %v364, %v565
    %v567 = vpop.f32.mrb[0].mxu0
    %v568 = vadd.f32 %v368, %v567
    %v569 = vpop.f32.mrb[0].mxu0
    %v570 = vadd.f32 %v364, %v569
    %v571 = vpop.f32.mrb[0].mxu0
    %v572 = vadd.f32 %v368, %v571
    %573 = vdwg.mxu0
    %574 = vst [vmem:[#allocation8] sm:$0xff] %v566
    %575 = vst [vmem:[#allocation8 + $0x8] sm:$0xff] %v568
    %576 = vst [vmem:[#allocation8 + $0x10] sm:$0xff] %v570
    %577 = vst [vmem:[#allocation8 + $0x18] sm:$0xff] %v572
    // Predicated region
    $region34: #{tpu_custom_call.1} parent=1 // pred_check
      _
    $region35: #{tpu_custom_call.1} parent=1 // pred_check_branch
      %579 = sbr.rel (0) target = $region37
    $region36: #{tpu_custom_call.1} parent=1 // pred_region
      %s581 = ssub.s32 512, 512
      %582 = vsyncadd [#allocation4], %s581
      %s583 = sshll.u32 [#allocation8], 4
      %s584 = int_to_ptr.vmem [resolvable:$true] %s583
      %589 = dma.vmem_to_hbm [thread:$0]  %s584, 512, %s5, [#allocation4], 256, 256, 16
    $region37: #{tpu_custom_call.1} parent=1 // pred_fallthru
      _
    // Predicated region
    $region38: #{tpu_custom_call.1} parent=1 // pred_check
      _
    $region39: #{tpu_custom_call.1} parent=1 // pred_check_branch
      %591 = sbr.rel (0) target = $region41
    $region40: #{tpu_custom_call.1} parent=1 // pred_region
      %592 = dma.done [#allocation4], 512
    $region41: #{tpu_custom_call.1} parent=1 // pred_fallthru
      _
    %593 = vsyncpa [#allocation3], 1
    %594 = vsyncpa [#allocation6], 1
    %595 = vsyncpa [#allocation4], 1

</llo_original>
